<compile_context>
chip_gen: v6e
topology: v6e:2x2x1
jax: 0.10.0
libtpu: 0.0.40
codegen_flags: <defaults>
</compile_context>

<pallas_src>
import functools

import jax
import jax.numpy as jnp
from jax.experimental import pallas as pl
from jax.experimental.pallas import tpu as pltpu

_LANE = 128   # TPU lane width
_SUB = 8      # f32 sublane tiling


def _ce_kernel(logits_ref, labels_ref, lsum_ref, lcnt_ref, *,
               num_classes, ignore_index):
    """Per-grid-step CE partial sums.

    Block shapes (batch dim squeezed out):
      logits_ref : (C, R, 128)  native dtype
      labels_ref : (R, 128)     int32 (padded tail == ignore_index)
      lsum_ref   : (P, 128)     f32 partial loss sum   (P = min(R, 8))
      lcnt_ref   : (P, 128)     f32 partial valid count
    """
    lab = labels_ref[...]                                  # (R, 128) int32

    # ---- running max over classes: C-1 elementwise VPU maxima ----
    m = logits_ref[0].astype(jnp.float32)                  # (R, 128)
    for c in range(1, num_classes):
        m = jnp.maximum(m, logits_ref[c].astype(jnp.float32))

    # ---- sum-exp and target-logit select, one elementwise pass per class ----
    sumexp = jnp.zeros_like(m)
    tgt = jnp.zeros_like(m)
    for c in range(num_classes):
        xc = logits_ref[c].astype(jnp.float32)
        sumexp = sumexp + jnp.exp(xc - m)
        tgt = jnp.where(lab == c, xc, tgt)

    lse = m + jnp.log(sumexp)                              # log-sum-exp, (R, 128)

    valid = lab != ignore_index                            # also masks padded /
    per_pos = jnp.where(valid, lse - tgt, 0.0)             # out-of-bounds rows
    per_cnt = valid.astype(jnp.float32)

    # ---- reduce rows in vreg-aligned groups -> lane-dense (P, 128) partials ----
    r = lab.shape[0]
    p = lsum_ref.shape[0]                                  # 8 (or R when R < 8)
    lsum_ref[...] = per_pos.reshape(r // p, p, _LANE).sum(axis=0)
    lcnt_ref[...] = per_cnt.reshape(r // p, p, _LANE).sum(axis=0)


def cross_entropy_loss(predicts, labels, *, loss_weight=1.0, ignore_index=-1,
                       r_tile=None, logits_block_bytes=2 * 1024 * 1024):
    """predicts: (B, C, H, W) float logits; labels: (B, H, W) int."""
    b, c, h, w = predicts.shape
    s = h * w

    # ---- logits in native NCHW order: (B, C, S) -> (B, C, R, 128), free reshape ----
    s_pad = pl.cdiv(s, _LANE) * _LANE
    logits = predicts.reshape(b, c, s)
    if s_pad != s:
        # rare: H*W not a multiple of 128 — one padding copy of the logits
        logits = jnp.pad(logits, ((0, 0), (0, 0), (0, s_pad - s)))
    r_total = s_pad // _LANE
    logits = logits.reshape(b, c, r_total, _LANE)

    # ---- spatial row tile sized from a VMEM block budget (double-buffered) ----
    if r_tile is None:
        if r_total <= _SUB:
            r_tile = r_total                               # full extent (legal block)
        else:
            itemsize = jnp.dtype(predicts.dtype).itemsize
            rt = (logits_block_bytes // (c * _LANE * itemsize)) // _SUB * _SUB
            r_tile = int(min(max(rt, _SUB), (r_total // _SUB) * _SUB))
    n_r = pl.cdiv(r_total, r_tile)
    p_rows = min(r_tile, _SUB)

    # ---- labels: pad the (small) label array to the tiled extent with
    #      ignore_index; this also masks any OOB logits rows in the last tile ----
    r_lab = n_r * r_tile
    labs = labels.reshape(b, s).astype(jnp.int32)
    if r_lab * _LANE != s:
        labs = jnp.pad(labs, ((0, 0), (0, r_lab * _LANE - s)),
                       constant_values=ignore_index)
    labs = labs.reshape(b, r_lab, _LANE)

    kernel = functools.partial(_ce_kernel, num_classes=c,
                               ignore_index=ignore_index)

    part_shape = jax.ShapeDtypeStruct((b, n_r, p_rows, _LANE), jnp.float32)
    out_spec = pl.BlockSpec((None, None, p_rows, _LANE),
                            lambda bi, ri: (bi, ri, 0, 0))

    loss_parts, cnt_parts = pl.pallas_call(
        kernel,
        out_shape=(part_shape, part_shape),
        grid=(b, n_r),
        in_specs=[
            pl.BlockSpec((None, c, r_tile, _LANE), lambda bi, ri: (bi, 0, ri, 0)),
            pl.BlockSpec((None, r_tile, _LANE), lambda bi, ri: (bi, ri, 0)),
        ],
        out_specs=(out_spec, out_spec),
        compiler_params=pltpu.CompilerParams(
            dimension_semantics=("parallel", "parallel"),
            vmem_limit_bytes=32 * 1024 * 1024),
    )(logits, labs)

    # reduction='mean' over non-ignored pixels (NaN if none — matches PyTorch)
    loss = jnp.sum(loss_parts) / jnp.sum(cnt_parts)
    return loss * jnp.asarray(loss_weight, jnp.float32)


def _reference_ce(predicts, labels, *, loss_weight=1.0, ignore_index=-1):
    b, c, h, w = predicts.shape
    x = jnp.transpose(predicts, (0, 2, 3, 1)).reshape(-1, c).astype(jnp.float32)
    t = labels.reshape(-1).astype(jnp.int32)
    logp = jax.nn.log_softmax(x, axis=-1)
    safe_t = jnp.clip(t, 0, c - 1)
    nll = -jnp.take_along_axis(logp, safe_t[:, None], axis=-1)[:, 0]
    valid = t != ignore_index
    return (jnp.sum(jnp.where(valid, nll, 0.0)) / jnp.sum(valid)) * loss_weight


if __name__ == "__main__":
    key = jax.random.PRNGKey(0)
    k1, k2 = jax.random.split(key)

    B, C, H, W = 2, 4, 16, 16
    predicts = jax.random.normal(k1, (B, C, H, W), dtype=jnp.float32)
    labels = jax.random.randint(k2, (B, H, W), minval=0, maxval=C, dtype=jnp.int32)
    # sprinkle in some ignored pixels
    labels = labels.at[0, 0, :4].set(-1)

    loss = cross_entropy_loss(predicts, labels, loss_weight=1.0, ignore_index=-1)
    jax.block_until_ready(loss)

    ref = _reference_ce(predicts, labels, loss_weight=1.0, ignore_index=-1)
    assert jnp.allclose(loss, ref, atol=1e-5, rtol=1e-5), (loss, ref)

    print("KERNEL_OK")
</pallas_src>

<mosaic_0001>
module attributes {stable_mosaic.version = 11 : i64} {
  func.func @_ce_kernel(%arg0: i32, %arg1: i32, %arg2: memref<1x4x2x128xf32, #tpu.memory_space<vmem>>, %arg3: memref<1x2x128xi32, #tpu.memory_space<vmem>>, %arg4: memref<1x1x2x128xf32, #tpu.memory_space<vmem>>, %arg5: memref<1x1x2x128xf32, #tpu.memory_space<vmem>>) attributes {dimension_semantics = [#tpu.dimension_semantics<parallel>, #tpu.dimension_semantics<parallel>], iteration_bounds = array<i64: 2, 1>, scalar_prefetch = 0 : i64, scratch_operands = 0 : i64, tpu.core_type = #tpu.core_type<tc>, window_params = [{transform_indices = @transform_0, window_bounds = array<i64: 1, 4, 2, 128>}, {transform_indices = @transform_1, window_bounds = array<i64: 1, 2, 128>}, {transform_indices = @transform_2, window_bounds = array<i64: 1, 1, 2, 128>}, {transform_indices = @transform_3, window_bounds = array<i64: 1, 1, 2, 128>}]} {
    %c0 = arith.constant 0 : index
    %c0_0 = arith.constant 0 : index
    %c0_1 = arith.constant 0 : index
    %0 = vector.load %arg3[%c0, %c0_0, %c0_1] : memref<1x2x128xi32, #tpu.memory_space<vmem>>, vector<1x2x128xi32>
    %1 = vector.shape_cast %0 : vector<1x2x128xi32> to vector<2x128xi32>
    %c0_2 = arith.constant 0 : index
    %c0_3 = arith.constant 0 : index
    %c0_4 = arith.constant 0 : index
    %c0_5 = arith.constant 0 : index
    %2 = vector.load %arg2[%c0_2, %c0_3, %c0_4, %c0_5] : memref<1x4x2x128xf32, #tpu.memory_space<vmem>>, vector<1x1x2x128xf32>
    %3 = vector.shape_cast %2 : vector<1x1x2x128xf32> to vector<2x128xf32>
    %c0_6 = arith.constant 0 : index
    %c1 = arith.constant 1 : index
    %c0_7 = arith.constant 0 : index
    %c0_8 = arith.constant 0 : index
    %4 = vector.load %arg2[%c0_6, %c1, %c0_7, %c0_8] : memref<1x4x2x128xf32, #tpu.memory_space<vmem>>, vector<1x1x2x128xf32>
    %5 = vector.shape_cast %4 : vector<1x1x2x128xf32> to vector<2x128xf32>
    %6 = arith.maximumf %3, %5 : vector<2x128xf32>
    %c0_9 = arith.constant 0 : index
    %c2 = arith.constant 2 : index
    %c0_10 = arith.constant 0 : index
    %c0_11 = arith.constant 0 : index
    %7 = vector.load %arg2[%c0_9, %c2, %c0_10, %c0_11] : memref<1x4x2x128xf32, #tpu.memory_space<vmem>>, vector<1x1x2x128xf32>
    %8 = vector.shape_cast %7 : vector<1x1x2x128xf32> to vector<2x128xf32>
    %9 = arith.maximumf %6, %8 : vector<2x128xf32>
    %c0_12 = arith.constant 0 : index
    %c3 = arith.constant 3 : index
    %c0_13 = arith.constant 0 : index
    %c0_14 = arith.constant 0 : index
    %10 = vector.load %arg2[%c0_12, %c3, %c0_13, %c0_14] : memref<1x4x2x128xf32, #tpu.memory_space<vmem>>, vector<1x1x2x128xf32>
    %11 = vector.shape_cast %10 : vector<1x1x2x128xf32> to vector<2x128xf32>
    %12 = arith.maximumf %9, %11 : vector<2x128xf32>
    %cst = arith.constant 0.000000e+00 : f32
    %13 = vector.broadcast %cst : f32 to vector<2x128xf32>
    %cst_15 = arith.constant 0.000000e+00 : f32
    %14 = vector.broadcast %cst_15 : f32 to vector<2x128xf32>
    %c0_16 = arith.constant 0 : index
    %c0_17 = arith.constant 0 : index
    %c0_18 = arith.constant 0 : index
    %c0_19 = arith.constant 0 : index
    %15 = vector.load %arg2[%c0_16, %c0_17, %c0_18, %c0_19] : memref<1x4x2x128xf32, #tpu.memory_space<vmem>>, vector<1x1x2x128xf32>
    %16 = vector.shape_cast %15 : vector<1x1x2x128xf32> to vector<2x128xf32>
    %17 = arith.subf %16, %12 : vector<2x128xf32>
    %18 = math.exp %17 : vector<2x128xf32>
    %19 = arith.addf %13, %18 : vector<2x128xf32>
    %c0_i32 = arith.constant 0 : i32
    %20 = vector.broadcast %c0_i32 : i32 to vector<2x128xi32>
    %21 = arith.cmpi eq, %1, %20 : vector<2x128xi32>
    %22 = arith.select %21, %16, %14 : vector<2x128xi1>, vector<2x128xf32>
    %c0_20 = arith.constant 0 : index
    %c1_21 = arith.constant 1 : index
    %c0_22 = arith.constant 0 : index
    %c0_23 = arith.constant 0 : index
    %23 = vector.load %arg2[%c0_20, %c1_21, %c0_22, %c0_23] : memref<1x4x2x128xf32, #tpu.memory_space<vmem>>, vector<1x1x2x128xf32>
    %24 = vector.shape_cast %23 : vector<1x1x2x128xf32> to vector<2x128xf32>
    %25 = arith.subf %24, %12 : vector<2x128xf32>
    %26 = math.exp %25 : vector<2x128xf32>
    %27 = arith.addf %19, %26 : vector<2x128xf32>
    %c1_i32 = arith.constant 1 : i32
    %28 = vector.broadcast %c1_i32 : i32 to vector<2x128xi32>
    %29 = arith.cmpi eq, %1, %28 : vector<2x128xi32>
    %30 = arith.select %29, %24, %22 : vector<2x128xi1>, vector<2x128xf32>
    %c0_24 = arith.constant 0 : index
    %c2_25 = arith.constant 2 : index
    %c0_26 = arith.constant 0 : index
    %c0_27 = arith.constant 0 : index
    %31 = vector.load %arg2[%c0_24, %c2_25, %c0_26, %c0_27] : memref<1x4x2x128xf32, #tpu.memory_space<vmem>>, vector<1x1x2x128xf32>
    %32 = vector.shape_cast %31 : vector<1x1x2x128xf32> to vector<2x128xf32>
    %33 = arith.subf %32, %12 : vector<2x128xf32>
    %34 = math.exp %33 : vector<2x128xf32>
    %35 = arith.addf %27, %34 : vector<2x128xf32>
    %c2_i32 = arith.constant 2 : i32
    %36 = vector.broadcast %c2_i32 : i32 to vector<2x128xi32>
    %37 = arith.cmpi eq, %1, %36 : vector<2x128xi32>
    %38 = arith.select %37, %32, %30 : vector<2x128xi1>, vector<2x128xf32>
    %c0_28 = arith.constant 0 : index
    %c3_29 = arith.constant 3 : index
    %c0_30 = arith.constant 0 : index
    %c0_31 = arith.constant 0 : index
    %39 = vector.load %arg2[%c0_28, %c3_29, %c0_30, %c0_31] : memref<1x4x2x128xf32, #tpu.memory_space<vmem>>, vector<1x1x2x128xf32>
    %40 = vector.shape_cast %39 : vector<1x1x2x128xf32> to vector<2x128xf32>
    %41 = arith.subf %40, %12 : vector<2x128xf32>
    %42 = math.exp %41 : vector<2x128xf32>
    %43 = arith.addf %35, %42 : vector<2x128xf32>
    %c3_i32 = arith.constant 3 : i32
    %44 = vector.broadcast %c3_i32 : i32 to vector<2x128xi32>
    %45 = arith.cmpi eq, %1, %44 : vector<2x128xi32>
    %46 = arith.select %45, %40, %38 : vector<2x128xi1>, vector<2x128xf32>
    %47 = math.log %43 : vector<2x128xf32>
    %48 = arith.addf %12, %47 : vector<2x128xf32>
    %c-1_i32 = arith.constant -1 : i32
    %49 = vector.broadcast %c-1_i32 : i32 to vector<2x128xi32>
    %50 = arith.cmpi ne, %1, %49 : vector<2x128xi32>
    %51 = arith.subf %48, %46 : vector<2x128xf32>
    %cst_32 = arith.constant 0.000000e+00 : f32
    %52 = vector.broadcast %cst_32 : f32 to vector<2x128xf32>
    %53 = arith.select %50, %51, %52 : vector<2x128xi1>, vector<2x128xf32>
    %54 = arith.extui %50 : vector<2x128xi1> to vector<2x128xi32>
    %55 = arith.sitofp %54 : vector<2x128xi32> to vector<2x128xf32>
    %56 = vector.shape_cast %53 : vector<2x128xf32> to vector<1x2x128xf32>
    %cst_33 = arith.constant dense<0.000000e+00> : vector<2x128xf32>
    %57 = vector.multi_reduction <add>, %56, %cst_33 [0] : vector<1x2x128xf32> to vector<2x128xf32>
    %c0_34 = arith.constant 0 : index
    %c0_35 = arith.constant 0 : index
    %c0_36 = arith.constant 0 : index
    %c0_37 = arith.constant 0 : index
    %58 = vector.load %arg4[%c0_34, %c0_35, %c0_36, %c0_37] : memref<1x1x2x128xf32, #tpu.memory_space<vmem>>, vector<1x1x2x128xf32>
    %59 = vector.shape_cast %58 : vector<1x1x2x128xf32> to vector<2x128xf32>
    %60 = vector.shape_cast %57 : vector<2x128xf32> to vector<1x1x2x128xf32>
    tpu.vector_store %arg4[%c0_34, %c0_35, %c0_36, %c0_37], %60 {strides = array<i32>} : memref<1x1x2x128xf32, #tpu.memory_space<vmem>>, vector<1x1x2x128xf32>,
    %61 = vector.shape_cast %55 : vector<2x128xf32> to vector<1x2x128xf32>
    %cst_38 = arith.constant dense<0.000000e+00> : vector<2x128xf32>
    %62 = vector.multi_reduction <add>, %61, %cst_38 [0] : vector<1x2x128xf32> to vector<2x128xf32>
    %c0_39 = arith.constant 0 : index
    %c0_40 = arith.constant 0 : index
    %c0_41 = arith.constant 0 : index
    %c0_42 = arith.constant 0 : index
    %63 = vector.load %arg5[%c0_39, %c0_40, %c0_41, %c0_42] : memref<1x1x2x128xf32, #tpu.memory_space<vmem>>, vector<1x1x2x128xf32>
    %64 = vector.shape_cast %63 : vector<1x1x2x128xf32> to vector<2x128xf32>
    %65 = vector.shape_cast %62 : vector<2x128xf32> to vector<1x1x2x128xf32>
    tpu.vector_store %arg5[%c0_39, %c0_40, %c0_41, %c0_42], %65 {strides = array<i32>} : memref<1x1x2x128xf32, #tpu.memory_space<vmem>>, vector<1x1x2x128xf32>,
    return
  }
  func.func @transform_0(%arg0: i32, %arg1: i32) -> (i32, i32, i32, i32) {
    %c0_i32 = arith.constant 0 : i32
    %c0_i32_0 = arith.constant 0 : i32
    %c0_i32_1 = arith.constant 0 : i32
    return %arg0, %c0_i32, %arg1, %c0_i32_0 : i32, i32, i32, i32
  }
  func.func @transform_1(%arg0: i32, %arg1: i32) -> (i32, i32, i32) {
    %c0_i32 = arith.constant 0 : i32
    %c0_i32_0 = arith.constant 0 : i32
    return %arg0, %arg1, %c0_i32 : i32, i32, i32
  }
  func.func @transform_2(%arg0: i32, %arg1: i32) -> (i32, i32, i32, i32) {
    %c0_i32 = arith.constant 0 : i32
    %c0_i32_0 = arith.constant 0 : i32
    %c0_i32_1 = arith.constant 0 : i32
    return %arg0, %arg1, %c0_i32, %c0_i32_0 : i32, i32, i32, i32
  }
  func.func @transform_3(%arg0: i32, %arg1: i32) -> (i32, i32, i32, i32) {
    %c0_i32 = arith.constant 0 : i32
    %c0_i32_0 = arith.constant 0 : i32
    %c0_i32_1 = arith.constant 0 : i32
    return %arg0, %arg1, %c0_i32, %c0_i32_0 : i32, i32, i32, i32
  }
}

</mosaic_0001>

<llo_original>
// kernel: tpu_custom_call.1
$region0: #{tpu_custom_call.1}
  #allocation0 [shape = 'u32[]', space=smem, size = 0x4, offset = 0x4, fixed_abs, tag = 'smem constant byte address 0x4 - core index']
  #allocation1 [shape = 'u32[144,128]{1,0:T(1,128)}', space=vmem, size = 0x12000, scoped, tag = 'internal scratch']
  %s0 = inlined_call_operand.hbm [shape: f32[2,4,2,128], index: 0, kind: input, shape index: {}]
  %s1 = inlined_call_operand.hbm [shape: s32[2,2,128], index: 1, kind: input, shape index: {}]
  %s2 = inlined_call_operand.hbm [shape: f32[2,1,2,128], index: 2, kind: output, shape index: {0}]
  %s3 = inlined_call_operand.hbm [shape: f32[2,1,2,128], index: 3, kind: output, shape index: {1}]
  %4 = xla_tuple %s2, %s3
  %s5 = sld [smem:[#allocation0]]
  $region57: #{tpu_custom_call.1} parent=0
    _
  %s7 = ssub.s32 1, %s5
  %s8 = scalar_select 0, %s7, %s5
  $region1: #{tpu_custom_call.1} parent=0
    #allocation2 [shape = 'u8[8192]{0}', space=vmem, size = 0x2000, scoped, tag = 'input window, operand 0']
    #allocation3 [shape = 's32[2]{0}', space=sflag, size = 0x8, scoped, tag = 'scoped memory for tpu_custom_call.1']
    #allocation4 [shape = 's32[2]{0}', space=sflag, size = 0x8, scoped, tag = 'scoped memory for tpu_custom_call.1']
    #allocation5 [shape = 'u8[2048]{0}', space=vmem, size = 0x800, scoped, tag = 'input window, operand 1']
    #allocation6 [shape = 's32[2]{0}', space=sflag, size = 0x8, scoped, tag = 'scoped memory for tpu_custom_call.1']
    #allocation7 [shape = 'u8[2048]{0}', space=vmem, size = 0x800, scoped, tag = 'output window, operand 0']
    #allocation8 [shape = 'u8[2048]{0}', space=vmem, size = 0x800, scoped, tag = 'output window, operand 1']
    #allocation9 [shape = 's32[2]{0}', space=sflag, size = 0x8, scoped, tag = 'scoped memory for tpu_custom_call.1']
    %9 = vsyncpa [#allocation3], 0
    %s10 = scalar_lea.sflag [#allocation3], 1
    %11 = vsyncpa %s10, 0
    %12 = vsyncpa [#allocation6], 0
    %s13 = scalar_lea.sflag [#allocation6], 1
    %14 = vsyncpa %s13, 0
    %15 = vsyncpa [#allocation4], 0
    %s16 = scalar_lea.sflag [#allocation4], 1
    %17 = vsyncpa %s16, 0
    %18 = vsyncpa [#allocation9], 0
    %s19 = scalar_lea.sflag [#allocation9], 1
    %20 = vsyncpa %s19, 0
    loop: start=0, step=1, limit=4
    $region2: #{tpu_custom_call.1} parent=1 // loop_pre_header
      _
    $region3: #{tpu_custom_call.1} parent=1 // loop_header
      %s22 = sphi 0, %s26
      %p23 = scmp.ge.s32.totalorder %s22, 4
      %s29 = sphi 0, %s41
      %s30 = sphi 0, %s37
      %s31 = sphi 0, %s29
      %s32 = sphi 0, %s30
      %s33 = sphi 0, %s31
      %s34 = sphi 0, %s32
      %s46 = sphi 0, %s48
      %s49 = sphi 0, %s46
      %s50 = sphi 0, %s49
      %s66 = sphi 0, %s50
      %s74 = sphi 0, %s76
      %s77 = sphi 0, %s74
      %s78 = sphi 0, %s77
      %s94 = sphi 0, %s78
      %s102 = sphi 0, %s104
      %s105 = sphi 0, %s102
      %s106 = sphi 0, %s105
      %s122 = sphi 0, %s106
      %s130 = sphi 0, %s132
      %s133 = sphi 0, %s130
      %s134 = sphi 0, %s133
      %s150 = sphi 0, %s134
    $region4: #{tpu_custom_call.1} parent=1 // loop_header_branch
      %25 = sbr.rel (%p23) target = $region8
    $region5: #{tpu_custom_call.1} parent=1 // loop_body
      %s27 = ssub.s32 %s22, 1
      %s28 = ssub.s32 %s22, 2
      %s35 = sadd.s32 1, %s30
      %p36 = scmp.ge.s32.totalorder %s35, 1
      %s37 = scalar_select %p36, 0, %s35
      %s38 = sadd.s32 1, %s29
      %s39 = scalar_select %p36, %s38, %s29
      %p40 = scmp.ge.s32.totalorder %s39, 2
      %s41 = scalar_select %p40, 0, %s39
      %s42 = ssub.s32 %s29, %s41
      %s43 = ssub.s32 %s30, %s37
      %s44 = sor.u32 %s42, %s43
      %p45 = scmp.eq.s32.totalorder %s44, 0
      %s47 = sadd.s32 %s46, 1
      %s48 = scalar_select %p45, %s46, %s47
      %p51 = pneg %p45
      %p52 = scmp.eq.s32.totalorder %s22, 1
      %p53 = por %p51, %p52
      %p54 = scmp.ne.s32.totalorder %s46, %s49
      %p55 = scmp.eq.s32.totalorder %s22, 0
      %p56 = por %p54, %p55
      %p57 = scmp.ne.s32.totalorder %s46, %s49
      %p58 = scmp.eq.s32.totalorder %s27, 1
      %p59 = por %p57, %p58
      %p60 = scmp.ne.s32.totalorder %s49, %s50
      %p61 = scmp.eq.s32.totalorder %s27, 0
      %p62 = por %p60, %p61
      %p63 = scmp.ne.s32.totalorder %s49, %s50
      %p64 = scmp.eq.s32.totalorder %s28, 1
      %p65 = por %p63, %p64
      %p67 = scmp.ne.s32.totalorder %s50, %s66
      %p68 = scmp.eq.s32.totalorder %s28, 0
      %p69 = por %p67, %p68
      %s70 = ssub.s32 %s29, %s41
      %s71 = ssub.s32 %s30, %s37
      %s72 = sor.u32 %s70, %s71
      %p73 = scmp.eq.s32.totalorder %s72, 0
      %s75 = sadd.s32 %s74, 1
      %s76 = scalar_select %p73, %s74, %s75
      %p79 = pneg %p73
      %p80 = scmp.eq.s32.totalorder %s22, 1
      %p81 = por %p79, %p80
      %p82 = scmp.ne.s32.totalorder %s74, %s77
      %p83 = scmp.eq.s32.totalorder %s22, 0
      %p84 = por %p82, %p83
      %p85 = scmp.ne.s32.totalorder %s74, %s77
      %p86 = scmp.eq.s32.totalorder %s27, 1
      %p87 = por %p85, %p86
      %p88 = scmp.ne.s32.totalorder %s77, %s78
      %p89 = scmp.eq.s32.totalorder %s27, 0
      %p90 = por %p88, %p89
      %p91 = scmp.ne.s32.totalorder %s77, %s78
      %p92 = scmp.eq.s32.totalorder %s28, 1
      %p93 = por %p91, %p92
      %p95 = scmp.ne.s32.totalorder %s78, %s94
      %p96 = scmp.eq.s32.totalorder %s28, 0
      %p97 = por %p95, %p96
      %s98 = ssub.s32 %s29, %s41
      %s99 = ssub.s32 %s30, %s37
      %s100 = sor.u32 %s98, %s99
      %p101 = scmp.eq.s32.totalorder %s100, 0
      %s103 = sadd.s32 %s102, 1
      %s104 = scalar_select %p101, %s102, %s103
      %p107 = pneg %p101
      %p108 = scmp.eq.s32.totalorder %s22, 1
      %p109 = por %p107, %p108
      %p110 = scmp.ne.s32.totalorder %s102, %s105
      %p111 = scmp.eq.s32.totalorder %s22, 0
      %p112 = por %p110, %p111
      %p113 = scmp.ne.s32.totalorder %s102, %s105
      %p114 = scmp.eq.s32.totalorder %s27, 1
      %p115 = por %p113, %p114
      %p116 = scmp.ne.s32.totalorder %s105, %s106
      %p117 = scmp.eq.s32.totalorder %s27, 0
      %p118 = por %p116, %p117
      %p119 = scmp.ne.s32.totalorder %s105, %s106
      %p120 = scmp.eq.s32.totalorder %s28, 1
      %p121 = por %p119, %p120
      %p123 = scmp.ne.s32.totalorder %s106, %s122
      %p124 = scmp.eq.s32.totalorder %s28, 0
      %p125 = por %p123, %p124
      %s126 = ssub.s32 %s29, %s41
      %s127 = ssub.s32 %s30, %s37
      %s128 = sor.u32 %s126, %s127
      %p129 = scmp.eq.s32.totalorder %s128, 0
      %s131 = sadd.s32 %s130, 1
      %s132 = scalar_select %p129, %s130, %s131
      %p135 = pneg %p129
      %p136 = scmp.eq.s32.totalorder %s22, 1
      %p137 = por %p135, %p136
      %p138 = scmp.ne.s32.totalorder %s130, %s133
      %p139 = scmp.eq.s32.totalorder %s22, 0
      %p140 = por %p138, %p139
      %p141 = scmp.ne.s32.totalorder %s130, %s133
      %p142 = scmp.eq.s32.totalorder %s27, 1
      %p143 = por %p141, %p142
      %p144 = scmp.ne.s32.totalorder %s133, %s134
      %p145 = scmp.eq.s32.totalorder %s27, 0
      %p146 = por %p144, %p145
      %p147 = scmp.ne.s32.totalorder %s133, %s134
      %p148 = scmp.eq.s32.totalorder %s28, 1
      %p149 = por %p147, %p148
      %p151 = scmp.ne.s32.totalorder %s134, %s150
      %p152 = scmp.eq.s32.totalorder %s28, 0
      %p153 = por %p151, %p152
      %p154 = scmp.le.s32.totalorder 1, %s22
      %p155 = scmp.lt.s32.totalorder %s22, 3
      %p156 = pnand %p154, %p155
      %p157 = pneg %p156
      // Predicated region
      $region9: #{tpu_custom_call.1} parent=5 // pred_check
        _
      $region10: #{tpu_custom_call.1} parent=5 // pred_check_branch
        %159 = sbr.rel (%p156) target = $region12
      $region11: #{tpu_custom_call.1} parent=5 // pred_region
        %s160 = ssub.s32 %s22, 1
      $region12: #{tpu_custom_call.1} parent=5 // pred_fallthru
        _
      %p161 = scmp.lt.s32.totalorder %s22, 2
      // Predicated region
      $region13: #{tpu_custom_call.1} parent=5 // pred_check
        %p162 = pneg %p161
      $region14: #{tpu_custom_call.1} parent=5 // pred_check_branch
        %164 = sbr.rel (%p162) target = $region16
      $region15: #{tpu_custom_call.1} parent=5 // pred_region
        // Predicated region
        $region17: #{tpu_custom_call.1} parent=15 // pred_check
          %p165 = pneg %p56
        $region18: #{tpu_custom_call.1} parent=15 // pred_check_branch
          %167 = sbr.rel (%p165) target = $region20
        $region19: #{tpu_custom_call.1} parent=15 // pred_region
          %s168 = sand.u32 %s46, 1
          %s169 = scalar_lea.sflag [#allocation3], %s168
          %s170 = sand.u32 %s46, 1
          %s171 = smul.addr %s170, 8
          %s172 = scalar_lea.vmem [#allocation2], %s171
          %s174 = ssub.s32 128, 128
          %175 = vsyncadd %s169, %s174
          %s176 = smul.addr %s29, 4
          %s177 = sadd.s32 %s30, %s176
          %s178 = smul.addr %s177, 32
          %s179 = scalar_lea.hbm %s0, %s178
          %s180 = sshll.u32 %s172, 4
          %s181 = int_to_ptr.vmem [resolvable:$true] %s180
          %186 = dma.hbm_to_vmem [thread:$0]  %s179, 128, %s181, %s169, 32, 32, 2
        $region20: #{tpu_custom_call.1} parent=15 // pred_fallthru
          _
        // Predicated region
        $region21: #{tpu_custom_call.1} parent=15 // pred_check
          %p187 = pneg %p84
        $region22: #{tpu_custom_call.1} parent=15 // pred_check_branch
          %189 = sbr.rel (%p187) target = $region24
        $region23: #{tpu_custom_call.1} parent=15 // pred_region
          %s190 = sand.u32 %s74, 1
          %s191 = scalar_lea.sflag [#allocation6], %s190
          %s192 = sand.u32 %s74, 1
          %s193 = smul.addr %s192, 2
          %s194 = scalar_lea.vmem [#allocation5], %s193
          %s196 = ssub.s32 32, 32
          %197 = vsyncadd %s191, %s196
          %s198 = sadd.s32 %s30, %s29
          %s199 = smul.addr %s198, 32
          %s200 = scalar_lea.hbm %s1, %s199
          %s202 = sshll.u32 %s194, 4
          %s203 = int_to_ptr.vmem [resolvable:$true] %s202
          %205 = dma.hbm_to_vmem [thread:$0]  %s200, 32, %s203, %s191
        $region24: #{tpu_custom_call.1} parent=15 // pred_fallthru
          _
      $region16: #{tpu_custom_call.1} parent=5 // pred_fallthru
        _
      %p206 = scmp.le.s32.totalorder 1, %s22
      %p207 = scmp.lt.s32.totalorder %s22, 3
      %p208 = pnand %p206, %p207
      %p209 = pneg %p208
      // Predicated region
      $region25: #{tpu_custom_call.1} parent=5 // pred_check
        _
      $region26: #{tpu_custom_call.1} parent=5 // pred_check_branch
        %211 = sbr.rel (%p208) target = $region28
      $region27: #{tpu_custom_call.1} parent=5 // pred_region
        %s212 = ssub.s32 %s22, 1
        %s213 = sand.u32 %s49, 1
        %s214 = scalar_lea.sflag [#allocation3], %s213
        %s215 = sand.u32 %s49, 1
        %s216 = smul.addr %s215, 8
        %s217 = scalar_lea.vmem [#allocation2], %s216
        // Predicated region
        $region29: #{tpu_custom_call.1} parent=27 // pred_check
          %p218 = pneg %p62
        $region30: #{tpu_custom_call.1} parent=27 // pred_check_branch
          %220 = sbr.rel (%p218) target = $region32
        $region31: #{tpu_custom_call.1} parent=27 // pred_region
          %221 = dma.done %s214, 128
        $region32: #{tpu_custom_call.1} parent=27 // pred_fallthru
          _
        %s222 = sand.u32 %s77, 1
        %s223 = scalar_lea.sflag [#allocation6], %s222
        %s224 = sand.u32 %s77, 1
        %s225 = smul.addr %s224, 2
        %s226 = scalar_lea.vmem [#allocation5], %s225
        // Predicated region
        $region33: #{tpu_custom_call.1} parent=27 // pred_check
          %p227 = pneg %p90
        $region34: #{tpu_custom_call.1} parent=27 // pred_check_branch
          %229 = sbr.rel (%p227) target = $region36
        $region35: #{tpu_custom_call.1} parent=27 // pred_region
          %230 = dma.done %s223, 32
        $region36: #{tpu_custom_call.1} parent=27 // pred_fallthru
          _
        %s231 = sand.u32 %s49, 1
        %s232 = scalar_lea.sflag [#allocation3], %s231
        %s233 = sand.u32 %s49, 1
        %s234 = smul.addr %s233, 8
        %s235 = scalar_lea.vmem [#allocation2], %s234
        %p236 = pneg %p62
        %p237 = pneg %p59
        %s238 = sand.u32 %s77, 1
        %s239 = scalar_lea.sflag [#allocation6], %s238
        %s240 = sand.u32 %s77, 1
        %s241 = smul.addr %s240, 2
        %s242 = scalar_lea.vmem [#allocation5], %s241
        %p243 = pneg %p90
        %p244 = pneg %p87
        %p245 = pneg %p118
        %p246 = pneg %p115
        %s247 = sand.u32 %s105, 1
        %s248 = scalar_lea.sflag [#allocation4], %s247
        %s249 = sand.u32 %s105, 1
        %s250 = smul.addr %s249, 2
        %s251 = scalar_lea.vmem [#allocation7], %s250
        %p252 = pneg %p146
        %p253 = pneg %p143
        %s254 = sand.u32 %s133, 1
        %s255 = scalar_lea.sflag [#allocation9], %s254
        %s256 = sand.u32 %s133, 1
        %s257 = smul.addr %s256, 2
        %s258 = scalar_lea.vmem [#allocation8], %s257
        %v259 = vld [vmem:[%s226] sm:$0x3]
        %v260 = vld [vmem:[%s217] sm:$0x3]
        %s261 = scalar_lea.vmem %s217, 2 [#allocation2]
        %v262 = vld [vmem:[%s261] sm:$0x3]
        %v263 = vmax.f32 %v260, %v262
        %s264 = scalar_lea.vmem %s217, 4 [#allocation2]
        %v265 = vld [vmem:[%s264] sm:$0x3]
        %v266 = vmax.f32 %v263, %v265
        %s267 = scalar_lea.vmem %s217, 6 [#allocation2]
        %v268 = vld [vmem:[%s267] sm:$0x3]
        %v269 = vmax.f32 %v266, %v268
        %v270 = vsub.f32 %v260, %v269
        %v271 = vmul.f32 %v270, 1.442695
        %v272 = vpow.pop %v271
        %v273 = vadd.f32 %v272, 0.0
        %vm274 = vcmp.eq.s32.totalorder %v259, 0
        %v275 = vsel %vm274, %v260, 0.0
        %v276 = vsub.f32 %v262, %v269
        %v277 = vmul.f32 %v276, 1.442695
        %v278 = vpow.pop %v277
        %v279 = vadd.f32 %v273, %v278
        %vm280 = vcmp.eq.s32.totalorder %v259, 1
        %v281 = vsel %vm280, %v262, %v275
        %v282 = vsub.f32 %v265, %v269
        %v283 = vmul.f32 %v282, 1.442695
        %v284 = vpow.pop %v283
        %v285 = vadd.f32 %v279, %v284
        %vm286 = vcmp.eq.s32.totalorder %v259, 2
        %v287 = vsel %vm286, %v265, %v281
        %v288 = vsub.f32 %v268, %v269
        %v289 = vmul.f32 %v288, 1.442695
        %v290 = vpow.pop %v289
        %v291 = vadd.f32 %v285, %v290
        %vm292 = vcmp.eq.s32.totalorder %v259, 3
        %v293 = vsel %vm292, %v268, %v287
        %v294 = vlog2.pop %v291
        %v295 = vmul.f32 %v294, 0.6931472
        %v296 = vadd.f32 %v269, %v295
        %vm297 = vcmp.ne.s32.totalorder %v259, 4294967295
        %v298 = vsub.f32 %v296, %v293
        %v299 = vsel %vm297, %v298, 0.0
        %v300 = vsel %vm297, 1, 0
        %v301 = vcvt.s32.f32 %v300
        %v302 = vadd.f32 %v299, 0.0
        %303 = vst [vmem:[%s251] sm:$0x3] %v302
        %v304 = vadd.f32 %v301, 0.0
        %305 = vst [vmem:[%s258] sm:$0x3] %v304
        %s306 = sand.u32 %s105, 1
        %s307 = scalar_lea.sflag [#allocation4], %s306
        %s308 = sand.u32 %s105, 1
        %s309 = smul.addr %s308, 2
        %s310 = scalar_lea.vmem [#allocation7], %s309
        %s311 = sand.u32 %s133, 1
        %s312 = scalar_lea.sflag [#allocation9], %s311
        %s313 = sand.u32 %s133, 1
        %s314 = smul.addr %s313, 2
        %s315 = scalar_lea.vmem [#allocation8], %s314
        // Predicated region
        $region37: #{tpu_custom_call.1} parent=27 // pred_check
          %p316 = pneg %p115
        $region38: #{tpu_custom_call.1} parent=27 // pred_check_branch
          %318 = sbr.rel (%p316) target = $region40
        $region39: #{tpu_custom_call.1} parent=27 // pred_region
          %s320 = ssub.s32 32, 32
          %321 = vsyncadd %s307, %s320
          %s322 = sadd.s32 %s32, %s31
          %s323 = smul.addr %s322, 32
          %s324 = scalar_lea.hbm %s2, %s323
          %s326 = sshll.u32 %s310, 4
          %s327 = int_to_ptr.vmem [resolvable:$true] %s326
          %329 = dma.vmem_to_hbm [thread:$0]  %s327, 32, %s324, %s307
        $region40: #{tpu_custom_call.1} parent=27 // pred_fallthru
          _
        // Predicated region
        $region41: #{tpu_custom_call.1} parent=27 // pred_check
          %p330 = pneg %p143
        $region42: #{tpu_custom_call.1} parent=27 // pred_check_branch
          %332 = sbr.rel (%p330) target = $region44
        $region43: #{tpu_custom_call.1} parent=27 // pred_region
          %s334 = ssub.s32 32, 32
          %335 = vsyncadd %s312, %s334
          %s336 = sadd.s32 %s32, %s31
          %s337 = smul.addr %s336, 32
          %s338 = scalar_lea.hbm %s3, %s337
          %s340 = sshll.u32 %s315, 4
          %s341 = int_to_ptr.vmem [resolvable:$true] %s340
          %343 = dma.vmem_to_hbm [thread:$0]  %s341, 32, %s338, %s312
        $region44: #{tpu_custom_call.1} parent=27 // pred_fallthru
          _
      $region28: #{tpu_custom_call.1} parent=5 // pred_fallthru
        _
      %p344 = scmp.le.s32.totalorder 2, %s22
      // Predicated region
      $region45: #{tpu_custom_call.1} parent=5 // pred_check
        %p345 = pneg %p344
      $region46: #{tpu_custom_call.1} parent=5 // pred_check_branch
        %347 = sbr.rel (%p345) target = $region48
      $region47: #{tpu_custom_call.1} parent=5 // pred_region
        %s348 = ssub.s32 %s22, 2
        // Predicated region
        $region49: #{tpu_custom_call.1} parent=47 // pred_check
          %p349 = pneg %p121
        $region50: #{tpu_custom_call.1} parent=47 // pred_check_branch
          %351 = sbr.rel (%p349) target = $region52
        $region51: #{tpu_custom_call.1} parent=47 // pred_region
          %s352 = sand.u32 %s106, 1
          %s353 = scalar_lea.sflag [#allocation4], %s352
          %s354 = sand.u32 %s106, 1
          %s355 = smul.addr %s354, 2
          %s356 = scalar_lea.vmem [#allocation7], %s355
          %357 = dma.done %s353, 32
        $region52: #{tpu_custom_call.1} parent=47 // pred_fallthru
          _
        // Predicated region
        $region53: #{tpu_custom_call.1} parent=47 // pred_check
          %p358 = pneg %p149
        $region54: #{tpu_custom_call.1} parent=47 // pred_check_branch
          %360 = sbr.rel (%p358) target = $region56
        $region55: #{tpu_custom_call.1} parent=47 // pred_region
          %s361 = sand.u32 %s134, 1
          %s362 = scalar_lea.sflag [#allocation9], %s361
          %s363 = sand.u32 %s134, 1
          %s364 = smul.addr %s363, 2
          %s365 = scalar_lea.vmem [#allocation8], %s364
          %366 = dma.done %s362, 32
        $region56: #{tpu_custom_call.1} parent=47 // pred_fallthru
          _
      $region48: #{tpu_custom_call.1} parent=5 // pred_fallthru
        _
    $region6: #{tpu_custom_call.1} parent=1 // loop_footer
      %s26 = sadd.s32 1, %s22
    $region7: #{tpu_custom_call.1} parent=1 // loop_footer_branch
      %21 = sbr.rel target = $region3
    $region8: #{tpu_custom_call.1} parent=1 // loop_exit
      _
    %367 = vsyncpa [#allocation3], 1
    %s368 = scalar_lea.sflag [#allocation3], 1
    %369 = vsyncpa %s368, 1
    %370 = vsyncpa [#allocation6], 1
    %s371 = scalar_lea.sflag [#allocation6], 1
    %372 = vsyncpa %s371, 1
    %373 = vsyncpa [#allocation4], 1
    %s374 = scalar_lea.sflag [#allocation4], 1
    %375 = vsyncpa %s374, 1
    %376 = vsyncpa [#allocation9], 1
    %s377 = scalar_lea.sflag [#allocation9], 1
    %378 = vsyncpa %s377, 1

</llo_original>
